<compile_context>
chip_gen: v5e
topology: v5e:2x2
jax: 0.10.0
libtpu: 0.0.40
codegen_flags: <defaults>
</compile_context>

<pallas_src>
import functools

import jax
import jax.numpy as jnp
from jax.experimental import pallas as pl
from jax.experimental.pallas import tpu as pltpu

LANE = 128    # vreg lane width
SUBLANE = 8   # f32 sublane count


def _round_up(n, m):
    return ((n + m - 1) // m) * m


def mlp_kernel(x_ref, w1_ref, w2_ref, o_ref, *, in_size, hp):
    # fc1 + ReLU.  w1_ref packs [w1 (in_size rows); b1 (1 row); zero pad].
    w1 = w1_ref[:in_size, :]
    b1 = w1_ref[in_size:in_size + 1, :]
    h = jnp.dot(x_ref[...], w1, preferred_element_type=jnp.float32)
    h = jnp.maximum(h + b1, 0.0)

    # dropout(0.3): identity at inference time.
    # TODO(synk): training-mode stochastic dropout could be added with
    #             pltpu.prng_seed + pltpu.prng_random_bits if needed.

    # fc2 + sigmoid.  w2_ref packs [w2 + zero pad (hp rows); b2 (1 row); zero pad].
    w2 = w2_ref[:hp, :]
    b2 = w2_ref[hp:hp + 1, :]
    y = jnp.dot(h, w2, preferred_element_type=jnp.float32) + b2

    # sigmoid(y) = 0.5 * tanh(0.5 * y) + 0.5  -> single EUP transcendental push
    o_ref[...] = 0.5 * jnp.tanh(0.5 * y) + 0.5


def pack_params(w1, b1, w2, b2):
    """One-time packing: fold biases into the weight operands and pad to lane-dense shapes.

    w1: (in, hidden), b1: (hidden,), w2: (hidden, out), b2: (out,)
    Returns (w1p, w2p, out_size) where
      w1p: (round_up(in+1, 8),  round_up(hidden, 128))
      w2p: (round_up(hp+1,  8), round_up(out,    128))
    """
    in_size, hidden = w1.shape
    out_size = w2.shape[1]
    hp = _round_up(hidden, LANE)
    op = _round_up(out_size, LANE)
    r1 = _round_up(in_size + 1, SUBLANE)
    r2 = _round_up(hp + 1, SUBLANE)

    # All padded entries are exactly zero (required for ReLU-in-padded-lanes == 0).
    w1p = jnp.zeros((r1, hp), jnp.float32)
    w1p = w1p.at[:in_size, :hidden].set(w1.astype(jnp.float32))
    w1p = w1p.at[in_size, :hidden].set(b1.astype(jnp.float32))

    w2p = jnp.zeros((r2, op), jnp.float32)
    w2p = w2p.at[:hidden, :out_size].set(w2.astype(jnp.float32))
    w2p = w2p.at[hp, :out_size].set(b2.astype(jnp.float32))
    return w1p, w2p, out_size


@functools.partial(jax.jit, static_argnames=("out_size",))
def net_forward(x, w1p, w2p, out_size):
    """x: (B, in) f32. w1p/w2p from pack_params. Returns (B, out_size) f32."""
    B, in_size = x.shape
    hp = w1p.shape[1]
    op = w2p.shape[1]

    vmem_spec = pl.BlockSpec(memory_space=pltpu.MemorySpace.VMEM)

    flops = 2 * B * (in_size * hp + hp * op)
    bytes_accessed = 4 * (x.size + w1p.size + w2p.size + B * op)

    out_padded = pl.pallas_call(
        functools.partial(mlp_kernel, in_size=in_size, hp=hp),
        out_shape=jax.ShapeDtypeStruct((B, op), jnp.float32),
        in_specs=[vmem_spec, vmem_spec, vmem_spec],
        out_specs=vmem_spec,
        cost_estimate=pl.CostEstimate(
            flops=flops,
            transcendentals=B * op,
            bytes_accessed=bytes_accessed,
        ),
    )(x, w1p, w2p)

    # Padded output lanes hold sigmoid(0) = 0.5; slice the real columns.
    return out_padded[:, :out_size]
    # NOTE(v7x scaling): if batch grows beyond ~512, add a "parallel" batch
    # grid axis (256-row tiles) with the weight index_maps returning (0, 0)
    # so both TensorCores are used while W1'/W2' stay VMEM-resident.


def reference_forward(x, w1, b1, w2, b2):
    h = jnp.maximum(x @ w1 + b1, 0.0)
    return jax.nn.sigmoid(h @ w2 + b2)


if __name__ == "__main__":
    # Small shapes consistent with the module: Net(input_size, hidden_size=42, output_size)
    batch = 8
    input_size = 32
    hidden_size = 42
    output_size = 4

    key = jax.random.PRNGKey(0)
    kx, kw1, kb1, kw2, kb2 = jax.random.split(key, 5)

    x = jax.random.normal(kx, (batch, input_size), dtype=jnp.float32)
    # Deterministic parameter init (uniform, like torch.nn.Linear's default scale)
    lim1 = 1.0 / jnp.sqrt(input_size)
    lim2 = 1.0 / jnp.sqrt(hidden_size)
    w1 = jax.random.uniform(kw1, (input_size, hidden_size), jnp.float32, -lim1, lim1)
    b1 = jax.random.uniform(kb1, (hidden_size,), jnp.float32, -lim1, lim1)
    w2 = jax.random.uniform(kw2, (hidden_size, output_size), jnp.float32, -lim2, lim2)
    b2 = jax.random.uniform(kb2, (output_size,), jnp.float32, -lim2, lim2)

    # One-time packing (model-init time), then jitted forward.
    w1p, w2p, out_size = pack_params(w1, b1, w2, b2)

    out = net_forward(x, w1p, w2p, out_size)
    out = jax.block_until_ready(out)

    ref = reference_forward(x, w1, b1, w2, b2)
    assert out.shape == (batch, output_size)
    assert jnp.allclose(out, ref, atol=1e-4, rtol=1e-4), "mismatch vs reference"

    print("KERNEL_OK")
</pallas_src>

<mosaic_0001>
module attributes {stable_mosaic.version = 11 : i64} {
  func.func @mlp_kernel(%arg0: memref<8x32xf32, #tpu.memory_space<vmem>>, %arg1: memref<40x128xf32, #tpu.memory_space<vmem>>, %arg2: memref<136x128xf32, #tpu.memory_space<vmem>>, %arg3: memref<8x128xf32, #tpu.memory_space<vmem>>) attributes {dimension_semantics = [], scalar_prefetch = 0 : i64, scratch_operands = 0 : i64, tpu.core_type = #tpu.core_type<tc>} {
    %c0 = arith.constant 0 : index
    %c0_0 = arith.constant 0 : index
    %0 = vector.load %arg1[%c0, %c0_0] : memref<40x128xf32, #tpu.memory_space<vmem>>, vector<32x128xf32>
    %c32 = arith.constant 32 : index
    %c0_1 = arith.constant 0 : index
    %1 = vector.load %arg1[%c32, %c0_1] : memref<40x128xf32, #tpu.memory_space<vmem>>, vector<1x128xf32>
    %c0_2 = arith.constant 0 : index
    %c0_3 = arith.constant 0 : index
    %2 = vector.load %arg0[%c0_2, %c0_3] : memref<8x32xf32, #tpu.memory_space<vmem>>, vector<8x32xf32>
    %cst = arith.constant dense<0.000000e+00> : vector<8x128xf32>
    %3 = tpu.matmul %2, %0, %cst {dimension_numbers = #tpu.dot_dimension_numbers<[1], [0], [0], [1], [0, 0, 1, 1], [], []>} : vector<8x32xf32>, vector<32x128xf32>, vector<8x128xf32> -> vector<8x128xf32>
    %4 = vector.broadcast %1 : vector<1x128xf32> to vector<8x128xf32>
    %5 = arith.addf %3, %4 : vector<8x128xf32>
    %cst_4 = arith.constant 0.000000e+00 : f32
    %6 = vector.broadcast %cst_4 : f32 to vector<8x128xf32>
    %7 = arith.maximumf %5, %6 : vector<8x128xf32>
    %c0_5 = arith.constant 0 : index
    %c0_6 = arith.constant 0 : index
    %8 = vector.load %arg2[%c0_5, %c0_6] : memref<136x128xf32, #tpu.memory_space<vmem>>, vector<128x128xf32>
    %c128 = arith.constant 128 : index
    %c0_7 = arith.constant 0 : index
    %9 = vector.load %arg2[%c128, %c0_7] : memref<136x128xf32, #tpu.memory_space<vmem>>, vector<1x128xf32>
    %cst_8 = arith.constant dense<0.000000e+00> : vector<8x128xf32>
    %10 = tpu.matmul %7, %8, %cst_8 {dimension_numbers = #tpu.dot_dimension_numbers<[1], [0], [0], [1], [0, 0, 1, 1], [], []>} : vector<8x128xf32>, vector<128x128xf32>, vector<8x128xf32> -> vector<8x128xf32>
    %11 = vector.broadcast %9 : vector<1x128xf32> to vector<8x128xf32>
    %12 = arith.addf %10, %11 : vector<8x128xf32>
    %cst_9 = arith.constant 5.000000e-01 : f32
    %13 = vector.broadcast %cst_9 : f32 to vector<8x128xf32>
    %14 = arith.mulf %13, %12 : vector<8x128xf32>
    %15 = math.tanh %14 : vector<8x128xf32>
    %cst_10 = arith.constant 5.000000e-01 : f32
    %16 = vector.broadcast %cst_10 : f32 to vector<8x128xf32>
    %17 = arith.mulf %16, %15 : vector<8x128xf32>
    %cst_11 = arith.constant 5.000000e-01 : f32
    %18 = vector.broadcast %cst_11 : f32 to vector<8x128xf32>
    %19 = arith.addf %17, %18 : vector<8x128xf32>
    %c0_12 = arith.constant 0 : index
    %c0_13 = arith.constant 0 : index
    %20 = vector.load %arg3[%c0_12, %c0_13] : memref<8x128xf32, #tpu.memory_space<vmem>>, vector<8x128xf32>
    tpu.vector_store %arg3[%c0_12, %c0_13], %19 {strides = array<i32>} : memref<8x128xf32, #tpu.memory_space<vmem>>, vector<8x128xf32>,
    return
  }
}

</mosaic_0001>

<llo_original>
// kernel: net_forward.1
$region0: #{net_forward.1}
  #allocation0 [shape = 'u32[]', space=smem, size = 0x4, offset = 0x4, fixed_abs, tag = 'smem constant byte address 0x4 - core index']
  #allocation1 [shape = 'u32[72,128]{1,0:T(1,128)}', space=vmem, size = 0x9000, scoped, tag = 'internal scratch']
  %s0 = inlined_call_operand.hbm [shape: f32[8,32], index: 0, kind: input, shape index: {}]
  %s1 = inlined_call_operand.hbm [shape: f32[40,128], index: 1, kind: input, shape index: {}]
  %s2 = inlined_call_operand.hbm [shape: f32[136,128], index: 2, kind: input, shape index: {}]
  %s3 = inlined_call_operand.vmem [shape: f32[8,128], index: 3, kind: output, shape index: {}]
  %s4 = sld [smem:[#allocation0]]
  $region34: #{net_forward.1} parent=0
    _
  %s6 = ssub.s32 1, %s4
  %s7 = scalar_select 0, %s6, %s4
  $region1: #{net_forward.1} parent=0
    #allocation2 [shape = 'u8[4096]{0}', space=vmem, size = 0x1000, scoped, tag = 'input window, operand 0, single buffered']
    #allocation3 [shape = 's32[1]{0}', space=sflag, size = 0x4, scoped, tag = 'scoped memory for net_forward.1']
    #allocation4 [shape = 'u8[20480]{0}', space=vmem, size = 0x5000, scoped, tag = 'input window, operand 1, single buffered']
    #allocation5 [shape = 's32[1]{0}', space=sflag, size = 0x4, scoped, tag = 'scoped memory for net_forward.1']
    #allocation6 [shape = 'u8[69632]{0}', space=vmem, size = 0x11000, scoped, tag = 'input window, operand 2, single buffered']
    %8 = vsyncpa [#allocation3], 0
    %9 = vsyncpa [#allocation5], 0
    // Predicated region
    $region2: #{net_forward.1} parent=1 // pred_check
      _
    $region3: #{net_forward.1} parent=1 // pred_check_branch
      %11 = sbr.rel (0) target = $region5
    $region4: #{net_forward.1} parent=1 // pred_region
      %13 = vsyncadd [#allocation3], 0
      %s15 = sshll.u32 %s0, 4
      %s16 = int_to_ptr.hbm [resolvable:$true] %s15
      %s17 = sshll.u32 [#allocation2], 4
      %s18 = int_to_ptr.vmem [resolvable:$true] %s17
      %20 = dma.hbm_to_vmem [thread:$0]  %s16, 128, %s18, [#allocation3]
    $region5: #{net_forward.1} parent=1 // pred_fallthru
      _
    // Predicated region
    $region6: #{net_forward.1} parent=1 // pred_check
      _
    $region7: #{net_forward.1} parent=1 // pred_check_branch
      %22 = sbr.rel (0) target = $region9
    $region8: #{net_forward.1} parent=1 // pred_region
      %24 = vsyncadd [#allocation5], 0
      %s25 = sshll.u32 %s1, 4
      %s26 = int_to_ptr.hbm [resolvable:$true] %s25
      %s27 = sshll.u32 [#allocation4], 4
      %s28 = int_to_ptr.vmem [resolvable:$true] %s27
      %33 = dma.hbm_to_vmem [thread:$0]  %s26, 640, %s28, [#allocation5], 128, 128, 8
    $region9: #{net_forward.1} parent=1 // pred_fallthru
      _
    // Predicated region
    $region10: #{net_forward.1} parent=1 // pred_check
      _
    $region11: #{net_forward.1} parent=1 // pred_check_branch
      %35 = sbr.rel (0) target = $region13
    $region12: #{net_forward.1} parent=1 // pred_region
      %37 = vsyncadd [#allocation5], 0
      %s38 = sshll.u32 %s2, 4
      %s39 = int_to_ptr.hbm [resolvable:$true] %s38
      %s40 = sshll.u32 [#allocation6], 4
      %s41 = int_to_ptr.vmem [resolvable:$true] %s40
      %46 = dma.hbm_to_vmem [thread:$0]  %s39, 2176, %s41, [#allocation5], 128, 128, 8
    $region13: #{net_forward.1} parent=1 // pred_fallthru
      _
    // Predicated region
    $region14: #{net_forward.1} parent=1 // pred_check
      _
    $region15: #{net_forward.1} parent=1 // pred_check_branch
      %48 = sbr.rel (0) target = $region17
    $region16: #{net_forward.1} parent=1 // pred_region
      %50 = dma.done [#allocation3], 128
    $region17: #{net_forward.1} parent=1 // pred_fallthru
      _
    // Predicated region
    $region18: #{net_forward.1} parent=1 // pred_check
      _
    $region19: #{net_forward.1} parent=1 // pred_check_branch
      %52 = sbr.rel (0) target = $region21
    $region20: #{net_forward.1} parent=1 // pred_region
      %54 = dma.done [#allocation5], 640
    $region21: #{net_forward.1} parent=1 // pred_fallthru
      _
    // Predicated region
    $region22: #{net_forward.1} parent=1 // pred_check
      _
    $region23: #{net_forward.1} parent=1 // pred_check_branch
      %56 = sbr.rel (0) target = $region25
    $region24: #{net_forward.1} parent=1 // pred_region
      %58 = dma.done [#allocation5], 2176
    $region25: #{net_forward.1} parent=1 // pred_fallthru
      _
    %v59 = vld [vmem:[#allocation4] sm:$0xff]
    %v60 = vld [vmem:[#allocation4 + $0x8] sm:$0xff]
    %v61 = vld [vmem:[#allocation4 + $0x10] sm:$0xff]
    %v62 = vld [vmem:[#allocation4 + $0x18] sm:$0xff]
    %v63 = vld [vmem:[#allocation4 + $0x20] sm:$0x1]
    %v64 = vld [vmem:[#allocation2] sm:$0xff]
    %v65 = vperm.slane %v63, 0
    %vm66 = vcmask 261120
    %v68 = vsel %vm66, %v64, 0
    %70 = vmatpush.msra.mxu0 0.0
    %71 = vmatpush.msra.mxu0 0.0
    %72 = vmatpush.msra.mxu0 0.0
    %73 = vmatpush.msra.mxu0 0.0
    %74 = vmatpush.msra.mxu0 0.0
    %75 = vmatpush.msra.mxu0 0.0
    %76 = vmatpush.msra.mxu0 0.0
    %77 = vmatpush.msra.mxu0 0.0
    %78 = vmatpush.msra.mxu0 0.0
    %79 = vmatpush.msra.mxu0 0.0
    %80 = vmatpush.msra.mxu0 0.0
    %81 = vmatpush.msra.mxu0 0.0
    %82 = vmatpush.msra.mxu0 %v62
    %83 = vmatpush.msra.mxu0 %v61
    %84 = vmatpush.msra.mxu0 %v60
    %85 = vmatpush.msra.mxu0 %v59
    %86 = vmatmul.f32.gmra.mxu0 %v68
    %v87 = vpop.f32.mrf.mxu0
    %v88 = vadd.f32 %v65, %v87
    %89 = vdwg.mxu0
    %v90 = vmax.f32 %v88, 0.0
    %v91 = vld [vmem:[#allocation6] sm:$0xff]
    %v92 = vld [vmem:[#allocation6 + $0x8] sm:$0xff]
    %v93 = vld [vmem:[#allocation6 + $0x10] sm:$0xff]
    %v94 = vld [vmem:[#allocation6 + $0x18] sm:$0xff]
    %v95 = vld [vmem:[#allocation6 + $0x20] sm:$0xff]
    %v96 = vld [vmem:[#allocation6 + $0x28] sm:$0xff]
    %v97 = vld [vmem:[#allocation6 + $0x30] sm:$0xff]
    %v98 = vld [vmem:[#allocation6 + $0x38] sm:$0xff]
    %v99 = vld [vmem:[#allocation6 + $0x40] sm:$0xff]
    %v100 = vld [vmem:[#allocation6 + $0x48] sm:$0xff]
    %v101 = vld [vmem:[#allocation6 + $0x50] sm:$0xff]
    %v102 = vld [vmem:[#allocation6 + $0x58] sm:$0xff]
    %v103 = vld [vmem:[#allocation6 + $0x60] sm:$0xff]
    %v104 = vld [vmem:[#allocation6 + $0x68] sm:$0xff]
    %v105 = vld [vmem:[#allocation6 + $0x70] sm:$0xff]
    %v106 = vld [vmem:[#allocation6 + $0x78] sm:$0xff]
    %v107 = vld [vmem:[#allocation6 + $0x80] sm:$0x1]
    %v108 = vperm.slane %v107, 0
    %109 = vmatpush.msra.mxu0 %v106
    %110 = vmatpush.msra.mxu0 %v105
    %111 = vmatpush.msra.mxu0 %v104
    %112 = vmatpush.msra.mxu0 %v103
    %113 = vmatpush.msra.mxu0 %v102
    %114 = vmatpush.msra.mxu0 %v101
    %115 = vmatpush.msra.mxu0 %v100
    %116 = vmatpush.msra.mxu0 %v99
    %117 = vmatpush.msra.mxu0 %v98
    %118 = vmatpush.msra.mxu0 %v97
    %119 = vmatpush.msra.mxu0 %v96
    %120 = vmatpush.msra.mxu0 %v95
    %121 = vmatpush.msra.mxu0 %v94
    %122 = vmatpush.msra.mxu0 %v93
    %123 = vmatpush.msra.mxu0 %v92
    %124 = vmatpush.msra.mxu0 %v91
    %125 = vmatmul.f32.gmra.mxu0 %v90
    %v126 = vpop.f32.mrf.mxu0
    %v127 = vadd.f32 %v108, %v126
    %128 = vdwg.mxu0
    %v129 = vmul.f32 %v127, 0.5
    %v130 = vtanh.pop %v129
    %v131 = vmul.f32 %v130, 0.5
    %v132 = vadd.f32 %v131, 0.5
    %133 = vst [vmem:[%s3] sm:$0xff] %v132
    // Predicated region
    $region26: #{net_forward.1} parent=1 // pred_check
      _
    $region27: #{net_forward.1} parent=1 // pred_check_branch
      %135 = sbr.rel (0) target = $region29
    $region28: #{net_forward.1} parent=1 // pred_region
      _
    $region29: #{net_forward.1} parent=1 // pred_fallthru
      _
    // Predicated region
    $region30: #{net_forward.1} parent=1 // pred_check
      _
    $region31: #{net_forward.1} parent=1 // pred_check_branch
      %137 = sbr.rel (0) target = $region33
    $region32: #{net_forward.1} parent=1 // pred_region
      _
    $region33: #{net_forward.1} parent=1 // pred_fallthru
      _
    %138 = vsyncpa [#allocation3], 1
    %139 = vsyncpa [#allocation5], 1

</llo_original>
